<compile_context>
chip_gen: v7x
topology: tpu7x:2x2x1
jax: 0.10.0
libtpu: 0.0.40
codegen_flags: <defaults>
</compile_context>

<pallas_src>
import functools

import jax
import jax.numpy as jnp
from jax.experimental import pallas as pl
from jax.experimental.pallas import tpu as pltpu


def cae_kernel(x_ref, w1_ref, w2_ref, o_ref, sum_acc, max_acc, *, hw, masked):
    # x_ref  : (1, C, THW)  input tile (channels on sublanes, spatial on lanes)
    # w1_ref : (C//16, C)   first 1x1 conv weight
    # w2_ref : (C, C//16)   second 1x1 conv weight
    # o_ref  : (1, C, 1)    per-batch attention values (post-sigmoid)
    # sum_acc/max_acc : (C, lane_w) f32 scratch accumulators
    k = pl.program_id(1)
    nk = pl.num_programs(1)

    @pl.when(k == 0)
    def _init():
        sum_acc[...] = jnp.zeros_like(sum_acc)
        max_acc[...] = jnp.full_like(max_acc, -jnp.inf)

    c = sum_acc.shape[0]
    lane_w = sum_acc.shape[-1]
    thw = x_ref.shape[-1]
    nsub = thw // lane_w

    psum = jnp.zeros((c, lane_w), jnp.float32)
    pmax = jnp.full((c, lane_w), -jnp.inf, jnp.float32)

    if masked:
        # hoisted iota (JAX does not CSE broadcasts inside the loop)
        col0 = jax.lax.broadcasted_iota(jnp.int32, (c, lane_w), 1)
        base = k * thw

    # Chunk-wise (VPU-only) partial reduction; keeps the XLU idle until the
    # epilogue so reduction compute stays hidden under the x DMA.
    for j in range(nsub):
        chunk = x_ref[0, :, j * lane_w:(j + 1) * lane_w].astype(jnp.float32)
        if masked:
            valid = (col0 + (base + j * lane_w)) < hw
            psum = psum + jnp.where(valid, chunk, 0.0)
            pmax = jnp.maximum(pmax, jnp.where(valid, chunk, -jnp.inf))
        else:
            psum = psum + chunk
            pmax = jnp.maximum(pmax, chunk)

    sum_acc[...] += psum
    max_acc[...] = jnp.maximum(max_acc[...], pmax)

    @pl.when(k == nk - 1)
    def _epilogue():
        # single cross-lane reduce per accumulator; divide by HW only here
        avg = jnp.sum(sum_acc[...], axis=-1, keepdims=True) * jnp.float32(1.0 / hw)  # (C, 1)
        mx = jnp.max(max_acc[...], axis=-1, keepdims=True)                           # (C, 1)

        # fuse the two FC passes: avg / max are the two columns of one matrix
        pooled = jnp.concatenate([avg, mx], axis=1)                                  # (C, 2)
        h = jnp.maximum(
            jnp.dot(w1_ref[...], pooled, preferred_element_type=jnp.float32), 0.0)   # (C//16, 2)
        out2 = jnp.dot(w2_ref[...], h, preferred_element_type=jnp.float32)           # (C, 2)
        logits = out2[:, 0:1] + out2[:, 1:2]                                         # (C, 1)
        o_ref[0] = jax.nn.sigmoid(logits).astype(o_ref.dtype)


def channel_attention_enhancement(x, w1, w2, *, tile_hw=None,
                                  tile_budget_bytes=4 * 1024 * 1024):
    """x: (B, C, H, W); w1: (C//16, C); w2: (C, C//16). Returns (B, C, 1, 1)."""
    B, C, H, W = x.shape
    HW = H * W
    hidden = w1.shape[0]
    assert w1.shape == (hidden, C) and w2.shape == (C, hidden)

    x_flat = x.reshape(B, C, HW)
    itemsize = jnp.dtype(x.dtype).itemsize
    lane = 128

    if tile_hw is None:
        if HW <= lane:
            tile_hw = HW  # full spatial dim; satisfies the block-shape constraint
        else:
            hw_pad = pl.cdiv(HW, lane) * lane
            # keep each (1, C, THW) buffer <= ~4 MiB so 2x double-buffering +
            # weights + scratch stays well inside every generation's VMEM budget
            cap = max(lane, (tile_budget_bytes // max(1, C * itemsize)) // lane * lane)
            tile_hw = min(hw_pad, cap)
    else:
        assert tile_hw == HW or tile_hw % lane == 0, "tile_hw must be HW or a multiple of 128"

    # Accumulator width: lane-aligned divisor of the tile width.  Widening it
    # shortens the unrolled fold loop (compile-time / code-size) for big tiles
    # with few channels; scratch (2 f32 buffers) is capped at ~2 MiB.
    if tile_hw % lane != 0:
        lane_w = tile_hw                      # single sub-128 tile (HW <= 128)
    else:
        lane_w = lane
        for cand in (1024, 512, 256):
            if tile_hw % cand == 0 and 2 * C * cand * 4 <= 2 * 1024 * 1024:
                lane_w = cand
                break

    nk = pl.cdiv(HW, tile_hw)
    masked = (nk * tile_hw) != HW

    kernel = functools.partial(cae_kernel, hw=HW, masked=masked)

    cost = pl.CostEstimate(
        flops=2 * B * C * HW + 8 * B * C * hidden,
        transcendentals=B * C,
        bytes_accessed=B * C * HW * itemsize + 2 * C * hidden * 4 + B * C * itemsize,
    )

    out = pl.pallas_call(
        kernel,
        out_shape=jax.ShapeDtypeStruct((B, C, 1), x.dtype),
        grid_spec=pltpu.PrefetchScalarGridSpec(
            num_scalar_prefetch=0,
            grid=(B, nk),
            in_specs=[
                pl.BlockSpec((1, C, tile_hw), lambda b, k: (b, 0, k)),
                pl.BlockSpec((hidden, C), lambda b, k: (0, 0)),
                pl.BlockSpec((C, hidden), lambda b, k: (0, 0)),
            ],
            out_specs=pl.BlockSpec((1, C, 1), lambda b, k: (b, 0, 0)),
            scratch_shapes=[
                pltpu.VMEM((C, lane_w), jnp.float32),  # partial sums
                pltpu.VMEM((C, lane_w), jnp.float32),  # running max
            ],
        ),
        compiler_params=pltpu.CompilerParams(
            dimension_semantics=("parallel", "arbitrary"),
            vmem_limit_bytes=32 * 1024 * 1024,
        ),
        cost_estimate=cost,
    )(x_flat, w1, w2)

    return out.reshape(B, C, 1, 1)


def reference(x, w1, w2):
    avg = jnp.mean(x.astype(jnp.float32), axis=(2, 3))   # (B, C)
    mx = jnp.max(x.astype(jnp.float32), axis=(2, 3))     # (B, C)

    def fc(v):
        h = jnp.maximum(v @ w1.T, 0.0)
        return h @ w2.T

    return jax.nn.sigmoid(fc(avg) + fc(mx)).reshape(x.shape[0], x.shape[1], 1, 1)


if __name__ == "__main__":
    # in_planes=32 -> hidden = 32 // 16 = 2 ; HW = 144 (not a multiple of 128)
    # so the tail-masking + multi-step accumulation paths are exercised.
    B, C, H, W = 2, 32, 12, 12
    hidden = C // 16

    key = jax.random.PRNGKey(0)
    kx, k1, k2 = jax.random.split(key, 3)

    x = jax.random.normal(kx, (B, C, H, W), dtype=jnp.float32)
    w1 = jax.random.normal(k1, (hidden, C), dtype=jnp.float32) * (1.0 / jnp.sqrt(C))
    w2 = jax.random.normal(k2, (C, hidden), dtype=jnp.float32) * (1.0 / jnp.sqrt(hidden))

    ref = reference(x, w1, w2)

    # forced small tile -> grid=(B, 2): tests scratch init/accumulate/epilogue + tail mask
    out = jax.block_until_ready(channel_attention_enhancement(x, w1, w2, tile_hw=128))
    assert out.shape == (B, C, 1, 1)
    assert jnp.allclose(out, ref, atol=1e-5, rtol=1e-5)

    # auto tile-size path (single padded tile, widened accumulator, VPU fold)
    out2 = jax.block_until_ready(channel_attention_enhancement(x, w1, w2))
    assert jnp.allclose(out2, ref, atol=1e-5, rtol=1e-5)

    print("KERNEL_OK")
</pallas_src>

<mosaic_0001>
module attributes {stable_mosaic.version = 11 : i64} {
  func.func @cae_kernel(%arg0: i32, %arg1: i32, %arg2: memref<1x32x128xf32, #tpu.memory_space<vmem>>, %arg3: memref<2x32xf32, #tpu.memory_space<vmem>>, %arg4: memref<32x2xf32, #tpu.memory_space<vmem>>, %arg5: memref<1x32x1xf32, #tpu.memory_space<vmem>>, %arg6: memref<32x128xf32, #tpu.memory_space<vmem>>, %arg7: memref<32x128xf32, #tpu.memory_space<vmem>>) attributes {dimension_semantics = [#tpu.dimension_semantics<parallel>, #tpu.dimension_semantics<arbitrary>], iteration_bounds = array<i64: 2, 2>, scalar_prefetch = 0 : i64, scratch_operands = 2 : i64, tpu.core_type = #tpu.core_type<tc>, window_params = [{transform_indices = @transform_0, window_bounds = array<i64: 1, 32, 128>}, {pipeline_mode = #tpu.pipeline_mode<synchronous>, transform_indices = @transform_1, window_bounds = array<i64: 2, 32>}, {pipeline_mode = #tpu.pipeline_mode<synchronous>, transform_indices = @transform_2, window_bounds = array<i64: 32, 2>}, {transform_indices = @transform_3, window_bounds = array<i64: 1, 32, 1>}]} {
    %c0_i32 = arith.constant 0 : i32
    %0 = arith.cmpi eq, %arg1, %c0_i32 : i32
    %1 = arith.extui %0 : i1 to i32
    %c0_i32_0 = arith.constant 0 : i32
    %2 = arith.cmpi ne, %1, %c0_i32_0 : i32
    scf.if %2 {
      %cst_16 = arith.constant 0.000000e+00 : f32
      %29 = vector.broadcast %cst_16 : f32 to vector<32x128xf32>
      %c0_17 = arith.constant 0 : index
      %c0_18 = arith.constant 0 : index
      %30 = vector.load %arg6[%c0_17, %c0_18] : memref<32x128xf32, #tpu.memory_space<vmem>>, vector<32x128xf32>
      tpu.vector_store %arg6[%c0_17, %c0_18], %29 {strides = array<i32>} : memref<32x128xf32, #tpu.memory_space<vmem>>, vector<32x128xf32>,
      %cst_19 = arith.constant 0xFF800000 : f32
      %31 = vector.broadcast %cst_19 : f32 to vector<32x128xf32>
      %c0_20 = arith.constant 0 : index
      %c0_21 = arith.constant 0 : index
      %32 = vector.load %arg7[%c0_20, %c0_21] : memref<32x128xf32, #tpu.memory_space<vmem>>, vector<32x128xf32>
      tpu.vector_store %arg7[%c0_20, %c0_21], %31 {strides = array<i32>} : memref<32x128xf32, #tpu.memory_space<vmem>>, vector<32x128xf32>,
    } else {
    }
    %cst = arith.constant 0.000000e+00 : f32
    %3 = vector.broadcast %cst : f32 to vector<32x128xf32>
    %cst_1 = arith.constant 0xFF800000 : f32
    %4 = vector.broadcast %cst_1 : f32 to vector<32x128xf32>
    %5 = tpu.iota {dimensions = array<i32: 1>} : vector<32x128xi32>
    %c128_i32 = arith.constant 128 : i32
    %6 = arith.muli %arg1, %c128_i32 : i32
    %c0 = arith.constant 0 : index
    %c0_2 = arith.constant 0 : index
    %c0_3 = arith.constant 0 : index
    %7 = vector.load %arg2[%c0, %c0_2, %c0_3] : memref<1x32x128xf32, #tpu.memory_space<vmem>>, vector<1x32x128xf32>
    %8 = vector.shape_cast %7 : vector<1x32x128xf32> to vector<32x128xf32>
    %c0_i32_4 = arith.constant 0 : i32
    %9 = arith.addi %6, %c0_i32_4 : i32
    %10 = vector.broadcast %9 : i32 to vector<32x128xi32>
    %11 = arith.addi %5, %10 : vector<32x128xi32>
    %c144_i32 = arith.constant 144 : i32
    %12 = vector.broadcast %c144_i32 : i32 to vector<32x128xi32>
    %13 = arith.cmpi slt, %11, %12 : vector<32x128xi32>
    %cst_5 = arith.constant 0.000000e+00 : f32
    %14 = vector.broadcast %cst_5 : f32 to vector<32x128xf32>
    %15 = arith.select %13, %8, %14 : vector<32x128xi1>, vector<32x128xf32>
    %16 = arith.addf %3, %15 : vector<32x128xf32>
    %cst_6 = arith.constant 0xFF800000 : f32
    %17 = vector.broadcast %cst_6 : f32 to vector<32x128xf32>
    %18 = arith.select %13, %8, %17 : vector<32x128xi1>, vector<32x128xf32>
    %19 = arith.maximumf %4, %18 : vector<32x128xf32>
    %c0_7 = arith.constant 0 : index
    %c0_8 = arith.constant 0 : index
    %20 = vector.load %arg6[%c0_7, %c0_8] : memref<32x128xf32, #tpu.memory_space<vmem>>, vector<32x128xf32>
    %21 = arith.addf %20, %16 : vector<32x128xf32>
    %c0_9 = arith.constant 0 : index
    %c0_10 = arith.constant 0 : index
    %22 = vector.load %arg6[%c0_9, %c0_10] : memref<32x128xf32, #tpu.memory_space<vmem>>, vector<32x128xf32>
    tpu.vector_store %arg6[%c0_9, %c0_10], %21 {strides = array<i32>} : memref<32x128xf32, #tpu.memory_space<vmem>>, vector<32x128xf32>,
    %c0_11 = arith.constant 0 : index
    %c0_12 = arith.constant 0 : index
    %23 = vector.load %arg7[%c0_11, %c0_12] : memref<32x128xf32, #tpu.memory_space<vmem>>, vector<32x128xf32>
    %24 = arith.maximumf %23, %19 : vector<32x128xf32>
    %c0_13 = arith.constant 0 : index
    %c0_14 = arith.constant 0 : index
    %25 = vector.load %arg7[%c0_13, %c0_14] : memref<32x128xf32, #tpu.memory_space<vmem>>, vector<32x128xf32>
    tpu.vector_store %arg7[%c0_13, %c0_14], %24 {strides = array<i32>} : memref<32x128xf32, #tpu.memory_space<vmem>>, vector<32x128xf32>,
    %c1_i32 = arith.constant 1 : i32
    %26 = arith.cmpi eq, %arg1, %c1_i32 : i32
    %27 = arith.extui %26 : i1 to i32
    %c0_i32_15 = arith.constant 0 : i32
    %28 = arith.cmpi ne, %27, %c0_i32_15 : i32
    scf.if %28 {
      %c0_16 = arith.constant 0 : index
      %c0_17 = arith.constant 0 : index
      %29 = vector.load %arg6[%c0_16, %c0_17] : memref<32x128xf32, #tpu.memory_space<vmem>>, vector<32x128xf32>
      %cst_18 = arith.constant dense<0.000000e+00> : vector<32xf32>
      %30 = vector.multi_reduction <add>, %29, %cst_18 [1] : vector<32x128xf32> to vector<32xf32>
      %31 = vector.shape_cast %30 : vector<32xf32> to vector<32x1xf32>
      %cst_19 = arith.constant 0.0069444445 : f32
      %32 = vector.broadcast %cst_19 : f32 to vector<32x1xf32>
      %33 = arith.mulf %31, %32 : vector<32x1xf32>
      %c0_20 = arith.constant 0 : index
      %c0_21 = arith.constant 0 : index
      %34 = vector.load %arg7[%c0_20, %c0_21] : memref<32x128xf32, #tpu.memory_space<vmem>>, vector<32x128xf32>
      %cst_22 = arith.constant dense<0xFF800000> : vector<32xf32>
      %35 = vector.multi_reduction <maximumf>, %34, %cst_22 [1] : vector<32x128xf32> to vector<32xf32>
      %36 = vector.shape_cast %35 : vector<32xf32> to vector<32x1xf32>
      %37 = tpu.concatenate %33, %36 in 1 : vector<32x1xf32>, vector<32x1xf32> -> vector<32x2xf32>
      %c0_23 = arith.constant 0 : index
      %c0_24 = arith.constant 0 : index
      %38 = vector.load %arg3[%c0_23, %c0_24] : memref<2x32xf32, #tpu.memory_space<vmem>>, vector<2x32xf32>
      %cst_25 = arith.constant dense<0.000000e+00> : vector<2x2xf32>
      %39 = tpu.matmul %38, %37, %cst_25 {dimension_numbers = #tpu.dot_dimension_numbers<[1], [0], [0], [1], [0, 0, 1, 1], [], []>} : vector<2x32xf32>, vector<32x2xf32>, vector<2x2xf32> -> vector<2x2xf32>
      %cst_26 = arith.constant 0.000000e+00 : f32
      %40 = vector.broadcast %cst_26 : f32 to vector<2x2xf32>
      %41 = arith.maximumf %39, %40 : vector<2x2xf32>
      %c0_27 = arith.constant 0 : index
      %c0_28 = arith.constant 0 : index
      %42 = vector.load %arg4[%c0_27, %c0_28] : memref<32x2xf32, #tpu.memory_space<vmem>>, vector<32x2xf32>
      %cst_29 = arith.constant dense<0.000000e+00> : vector<32x2xf32>
      %43 = tpu.matmul %42, %41, %cst_29 {dimension_numbers = #tpu.dot_dimension_numbers<[1], [0], [0], [1], [0, 0, 1, 1], [], []>} : vector<32x2xf32>, vector<2x2xf32>, vector<32x2xf32> -> vector<32x2xf32>
      %44 = vector.extract_strided_slice %43 {offsets = [0, 0], sizes = [32, 1], strides = [1, 1]} : vector<32x2xf32> to vector<32x1xf32>
      %45 = vector.extract_strided_slice %43 {offsets = [0, 1], sizes = [32, 1], strides = [1, 1]} : vector<32x2xf32> to vector<32x1xf32>
      %46 = arith.addf %44, %45 : vector<32x1xf32>
      %47 = arith.negf %46 : vector<32x1xf32>
      %48 = math.exp %47 : vector<32x1xf32>
      %cst_30 = arith.constant 1.000000e+00 : f32
      %49 = vector.broadcast %cst_30 : f32 to vector<32x1xf32>
      %50 = arith.addf %49, %48 : vector<32x1xf32>
      %51 = arith.divf %49, %50 : vector<32x1xf32>
      %c0_31 = arith.constant 0 : index
      %c0_32 = arith.constant 0 : index
      %c0_33 = arith.constant 0 : index
      %52 = vector.load %arg5[%c0_31, %c0_32, %c0_33] : memref<1x32x1xf32, #tpu.memory_space<vmem>>, vector<1x32x1xf32>
      %53 = vector.shape_cast %52 : vector<1x32x1xf32> to vector<32x1xf32>
      %54 = vector.shape_cast %51 : vector<32x1xf32> to vector<1x32x1xf32>
      tpu.vector_store %arg5[%c0_31, %c0_32, %c0_33], %54 {strides = array<i32>} : memref<1x32x1xf32, #tpu.memory_space<vmem>>, vector<1x32x1xf32>,
    } else {
    }
    return
  }
  func.func @transform_0(%arg0: i32, %arg1: i32) -> (i32, i32, i32) {
    %c0_i32 = arith.constant 0 : i32
    %c0_i32_0 = arith.constant 0 : i32
    return %arg0, %c0_i32, %arg1 : i32, i32, i32
  }
  func.func @transform_1(%arg0: i32, %arg1: i32) -> (i32, i32) {
    %c0_i32 = arith.constant 0 : i32
    %c0_i32_0 = arith.constant 0 : i32
    %c0_i32_1 = arith.constant 0 : i32
    return %c0_i32, %c0_i32_0 : i32, i32
  }
  func.func @transform_2(%arg0: i32, %arg1: i32) -> (i32, i32) {
    %c0_i32 = arith.constant 0 : i32
    %c0_i32_0 = arith.constant 0 : i32
    %c0_i32_1 = arith.constant 0 : i32
    return %c0_i32, %c0_i32_0 : i32, i32
  }
  func.func @transform_3(%arg0: i32, %arg1: i32) -> (i32, i32, i32) {
    %c0_i32 = arith.constant 0 : i32
    %c0_i32_0 = arith.constant 0 : i32
    %c0_i32_1 = arith.constant 0 : i32
    return %arg0, %c0_i32, %c0_i32_0 : i32, i32, i32
  }
}

</mosaic_0001>

<llo_original>
// kernel: tpu_custom_call.1
$region0: #{tpu_custom_call.1}
  #allocation0 [shape = 'u32[]', space=smem, size = 0x4, offset = 0x4, fixed_abs, tag = 'smem constant byte address 0x4 - core index']
  #allocation1 [shape = 'u32[144,128]{1,0:T(1,128)}', space=vmem, size = 0x12000, scoped, tag = 'internal scratch']
  #allocation2 [shape = 'f32[32,128]{1,0:T(8,128)}', space=vmem, size = 0x4000, scoped, tag = 'scratch operand']
  #allocation3 [shape = 'f32[32,128]{1,0:T(8,128)}', space=vmem, size = 0x4000, scoped, tag = 'scratch operand']
  %s0 = inlined_call_operand.hbm [shape: f32[2,32,144], index: 0, kind: input, shape index: {}]
  %s1 = inlined_call_operand.vmem [shape: f32[2,32], index: 1, kind: input, shape index: {}]
  %s2 = inlined_call_operand.vmem [shape: f32[32,2], index: 2, kind: input, shape index: {}]
  %s3 = inlined_call_operand.vmem [shape: f32[2,32,1], index: 3, kind: output, shape index: {}]
  %s4 = sld [smem:[#allocation0]]
  $region57: #{tpu_custom_call.1} parent=0
    _
  %s6 = ssub.s32 1, %s4
  %s7 = scalar_select 0, %s6, %s4
  $region1: #{tpu_custom_call.1} parent=0
    #allocation4 [shape = 'u8[32768]{0}', space=vmem, size = 0x8000, scoped, tag = 'input window, operand 0']
    #allocation5 [shape = 's32[2]{0}', space=sflag, size = 0x8, scoped, tag = 'scoped memory for tpu_custom_call.1']
    %8 = vsyncpa [#allocation5], 0
    %s9 = scalar_lea.sflag [#allocation5], 1
    %10 = vsyncpa %s9, 0
    loop: start=0, step=1, limit=6
    $region2: #{tpu_custom_call.1} parent=1 // loop_pre_header
      _
    $region3: #{tpu_custom_call.1} parent=1 // loop_header
      %s12 = sphi 0, %s16
      %p13 = scmp.ge.s32.totalorder %s12, 6
      %s19 = sphi 0, %s31
      %s20 = sphi 0, %s27
      %s21 = sphi 0, %s19
      %s22 = sphi 0, %s20
      %s23 = sphi 0, %s21
      %s24 = sphi 0, %s22
      %s36 = sphi 0, %s38
      %s39 = sphi 0, %s36
      %s40 = sphi 0, %s39
      %s56 = sphi 0, %s40
      %s60 = sphi 0, %s60
      %s62 = sphi 0, %s60
      %s63 = sphi 0, %s62
      %s77 = sphi 0, %s63
      %s81 = sphi 0, %s81
      %s83 = sphi 0, %s81
      %s84 = sphi 0, %s83
      %s98 = sphi 0, %s84
      %s104 = sphi 0, %s106
      %s107 = sphi 0, %s104
      %s108 = sphi 0, %s107
      %s124 = sphi 0, %s108
    $region4: #{tpu_custom_call.1} parent=1 // loop_header_branch
      %15 = sbr.rel (%p13) target = $region8
    $region5: #{tpu_custom_call.1} parent=1 // loop_body
      %s17 = ssub.s32 %s12, 1
      %s18 = ssub.s32 %s12, 2
      %s25 = sadd.s32 1, %s20
      %p26 = scmp.ge.s32.totalorder %s25, 2
      %s27 = scalar_select %p26, 0, %s25
      %s28 = sadd.s32 1, %s19
      %s29 = scalar_select %p26, %s28, %s19
      %p30 = scmp.ge.s32.totalorder %s29, 2
      %s31 = scalar_select %p30, 0, %s29
      %s32 = ssub.s32 %s19, %s31
      %s33 = ssub.s32 %s20, %s27
      %s34 = sor.u32 %s32, %s33
      %p35 = scmp.eq.s32.totalorder %s34, 0
      %s37 = sadd.s32 %s36, 1
      %s38 = scalar_select %p35, %s36, %s37
      %p41 = pneg %p35
      %p42 = scmp.eq.s32.totalorder %s12, 3
      %p43 = por %p41, %p42
      %p44 = scmp.ne.s32.totalorder %s36, %s39
      %p45 = scmp.eq.s32.totalorder %s12, 0
      %p46 = por %p44, %p45
      %p47 = scmp.ne.s32.totalorder %s36, %s39
      %p48 = scmp.eq.s32.totalorder %s17, 3
      %p49 = por %p47, %p48
      %p50 = scmp.ne.s32.totalorder %s39, %s40
      %p51 = scmp.eq.s32.totalorder %s17, 0
      %p52 = por %p50, %p51
      %p53 = scmp.ne.s32.totalorder %s39, %s40
      %p54 = scmp.eq.s32.totalorder %s18, 3
      %p55 = por %p53, %p54
      %p57 = scmp.ne.s32.totalorder %s40, %s56
      %p58 = scmp.eq.s32.totalorder %s18, 0
      %p59 = por %p57, %p58
      %s61 = sadd.s32 %s60, 1
      %p64 = scmp.eq.s32.totalorder %s12, 3
      %p65 = scmp.ne.s32.totalorder %s60, %s62
      %p66 = scmp.eq.s32.totalorder %s12, 0
      %p67 = por %p65, %p66
      %p68 = scmp.ne.s32.totalorder %s60, %s62
      %p69 = scmp.eq.s32.totalorder %s17, 3
      %p70 = por %p68, %p69
      %p71 = scmp.ne.s32.totalorder %s62, %s63
      %p72 = scmp.eq.s32.totalorder %s17, 0
      %p73 = por %p71, %p72
      %p74 = scmp.ne.s32.totalorder %s62, %s63
      %p75 = scmp.eq.s32.totalorder %s18, 3
      %p76 = por %p74, %p75
      %p78 = scmp.ne.s32.totalorder %s63, %s77
      %p79 = scmp.eq.s32.totalorder %s18, 0
      %p80 = por %p78, %p79
      %s82 = sadd.s32 %s81, 1
      %p85 = scmp.eq.s32.totalorder %s12, 3
      %p86 = scmp.ne.s32.totalorder %s81, %s83
      %p87 = scmp.eq.s32.totalorder %s12, 0
      %p88 = por %p86, %p87
      %p89 = scmp.ne.s32.totalorder %s81, %s83
      %p90 = scmp.eq.s32.totalorder %s17, 3
      %p91 = por %p89, %p90
      %p92 = scmp.ne.s32.totalorder %s83, %s84
      %p93 = scmp.eq.s32.totalorder %s17, 0
      %p94 = por %p92, %p93
      %p95 = scmp.ne.s32.totalorder %s83, %s84
      %p96 = scmp.eq.s32.totalorder %s18, 3
      %p97 = por %p95, %p96
      %p99 = scmp.ne.s32.totalorder %s84, %s98
      %p100 = scmp.eq.s32.totalorder %s18, 0
      %p101 = por %p99, %p100
      %s102 = ssub.s32 %s19, %s31
      %p103 = scmp.eq.s32.totalorder %s102, 0
      %s105 = sadd.s32 %s104, 1
      %s106 = scalar_select %p103, %s104, %s105
      %p109 = pneg %p103
      %p110 = scmp.eq.s32.totalorder %s12, 3
      %p111 = por %p109, %p110
      %p112 = scmp.ne.s32.totalorder %s104, %s107
      %p113 = scmp.eq.s32.totalorder %s12, 0
      %p114 = por %p112, %p113
      %p115 = scmp.ne.s32.totalorder %s104, %s107
      %p116 = scmp.eq.s32.totalorder %s17, 3
      %p117 = por %p115, %p116
      %p118 = scmp.ne.s32.totalorder %s107, %s108
      %p119 = scmp.eq.s32.totalorder %s17, 0
      %p120 = por %p118, %p119
      %p121 = scmp.ne.s32.totalorder %s107, %s108
      %p122 = scmp.eq.s32.totalorder %s18, 3
      %p123 = por %p121, %p122
      %p125 = scmp.ne.s32.totalorder %s108, %s124
      %p126 = scmp.eq.s32.totalorder %s18, 0
      %p127 = por %p125, %p126
      %p128 = scmp.le.s32.totalorder 1, %s12
      %p129 = scmp.lt.s32.totalorder %s12, 5
      %p130 = pnand %p128, %p129
      %p131 = pneg %p130
      // Predicated region
      $region9: #{tpu_custom_call.1} parent=5 // pred_check
        _
      $region10: #{tpu_custom_call.1} parent=5 // pred_check_branch
        %133 = sbr.rel (%p130) target = $region12
      $region11: #{tpu_custom_call.1} parent=5 // pred_region
        %s134 = ssub.s32 %s12, 1
        // Predicated region
        $region13: #{tpu_custom_call.1} parent=11 // pred_check
          %p135 = pneg %p73
        $region14: #{tpu_custom_call.1} parent=11 // pred_check_branch
          %137 = sbr.rel (%p135) target = $region16
        $region15: #{tpu_custom_call.1} parent=11 // pred_region
          _
        $region16: #{tpu_custom_call.1} parent=11 // pred_fallthru
          _
        // Predicated region
        $region17: #{tpu_custom_call.1} parent=11 // pred_check
          %p138 = pneg %p94
        $region18: #{tpu_custom_call.1} parent=11 // pred_check_branch
          %140 = sbr.rel (%p138) target = $region20
        $region19: #{tpu_custom_call.1} parent=11 // pred_region
          _
        $region20: #{tpu_custom_call.1} parent=11 // pred_fallthru
          _
      $region12: #{tpu_custom_call.1} parent=5 // pred_fallthru
        _
      %p141 = scmp.lt.s32.totalorder %s12, 4
      // Predicated region
      $region21: #{tpu_custom_call.1} parent=5 // pred_check
        %p142 = pneg %p141
      $region22: #{tpu_custom_call.1} parent=5 // pred_check_branch
        %144 = sbr.rel (%p142) target = $region24
      $region23: #{tpu_custom_call.1} parent=5 // pred_region
        // Predicated region
        $region25: #{tpu_custom_call.1} parent=23 // pred_check
          %p145 = pneg %p46
        $region26: #{tpu_custom_call.1} parent=23 // pred_check_branch
          %147 = sbr.rel (%p145) target = $region28
        $region27: #{tpu_custom_call.1} parent=23 // pred_region
          %s148 = sand.u32 %s36, 1
          %s149 = scalar_lea.sflag [#allocation5], %s148
          %s150 = sand.u32 %s36, 1
          %s151 = smul.addr %s150, 32
          %s152 = scalar_lea.vmem [#allocation4], %s151
          %s154 = ssub.s32 512, 512
          %155 = vsyncadd %s149, %s154
          %s156 = smul.addr %s19, 8
          %s157 = sadd.s32 %s20, %s156
          %s158 = smul.addr %s157, 128
          %s159 = scalar_lea.hbm %s0, %s158
          %s160 = sshll.u32 %s152, 4
          %s161 = int_to_ptr.vmem [resolvable:$true] %s160
          %166 = dma.hbm_to_vmem [thread:$0]  %s159, 512, %s161, %s149, 256, 128, 8
        $region28: #{tpu_custom_call.1} parent=23 // pred_fallthru
          _
      $region24: #{tpu_custom_call.1} parent=5 // pred_fallthru
        _
      %p167 = scmp.le.s32.totalorder 1, %s12
      %p168 = scmp.lt.s32.totalorder %s12, 5
      %p169 = pnand %p167, %p168
      %p170 = pneg %p169
      // Predicated region
      $region29: #{tpu_custom_call.1} parent=5 // pred_check
        _
      $region30: #{tpu_custom_call.1} parent=5 // pred_check_branch
        %172 = sbr.rel (%p169) target = $region32
      $region31: #{tpu_custom_call.1} parent=5 // pred_region
        %s173 = ssub.s32 %s12, 1
        %s174 = sand.u32 %s39, 1
        %s175 = scalar_lea.sflag [#allocation5], %s174
        %s176 = sand.u32 %s39, 1
        %s177 = smul.addr %s176, 32
        %s178 = scalar_lea.vmem [#allocation4], %s177
        // Predicated region
        $region33: #{tpu_custom_call.1} parent=31 // pred_check
          %p179 = pneg %p52
        $region34: #{tpu_custom_call.1} parent=31 // pred_check_branch
          %181 = sbr.rel (%p179) target = $region36
        $region35: #{tpu_custom_call.1} parent=31 // pred_region
          %182 = dma.done %s175, 512
        $region36: #{tpu_custom_call.1} parent=31 // pred_fallthru
          _
        %s183 = sand.u32 %s39, 1
        %s184 = scalar_lea.sflag [#allocation5], %s183
        %s185 = sand.u32 %s39, 1
        %s186 = smul.addr %s185, 32
        %s187 = scalar_lea.vmem [#allocation4], %s186
        %p188 = pneg %p52
        %p189 = pneg %p49
        %p190 = pneg %p73
        %p191 = pneg %p70
        %p192 = pneg %p94
        %p193 = pneg %p91
        %p194 = pneg %p120
        %p195 = pneg %p117
        %p196 = scmp.lt.s32.totalorder %s21, 1
        %s197 = scalar_select %p196, %s21, 1
        %s198 = smul.addr %s197, 4
        %s199 = smul.addr %s198, 8
        %s200 = scalar_lea.vmem %s3, %s199
        %p201 = scmp.lt.s32.totalorder %s21, 1
        %s202 = scalar_select %p201, %s21, 1
        %s203 = smul.addr %s202, 4
        %s204 = smul.addr %s203, 8
        %s205 = scalar_lea.vmem %s3, %s204
        %p206 = scmp.eq.s32.totalorder %s22, 0
        // Predicated region
        $region37: #{tpu_custom_call.1} parent=31 // pred_check
          %p207 = pneg %p206
        $region38: #{tpu_custom_call.1} parent=31 // pred_check_branch
          %209 = sbr.rel (%p207) target = $region40
        $region39: #{tpu_custom_call.1} parent=31 // pred_region
          %210 = vst [vmem:[#allocation2] sm:$0xff] 0.0
          %211 = vst [vmem:[#allocation2 + $0x8] sm:$0xff] 0.0
          %212 = vst [vmem:[#allocation2 + $0x10] sm:$0xff] 0.0
          %213 = vst [vmem:[#allocation2 + $0x18] sm:$0xff] 0.0
          %214 = vst [vmem:[#allocation3] sm:$0xff] -inf
          %215 = vst [vmem:[#allocation3 + $0x8] sm:$0xff] -inf
          %216 = vst [vmem:[#allocation3 + $0x10] sm:$0xff] -inf
          %217 = vst [vmem:[#allocation3 + $0x18] sm:$0xff] -inf
        $region40: #{tpu_custom_call.1} parent=31 // pred_fallthru
          _
        %v218 = vlaneseq
        %v219 = vand.u32 %v218, 127
        %s220 = smul.u32 %s22, 128
        %v221 = vld [vmem:[%s178] sm:$0xff]
        %v222 = vld [vmem:[%s178 + $0x8] sm:$0xff]
        %v223 = vld [vmem:[%s178 + $0x10] sm:$0xff]
        %v224 = vld [vmem:[%s178 + $0x18] sm:$0xff]
        %v225 = vstv %s220
        %v226 = vadd.s32 %v219, %v225
        %vm227 = vcmp.lt.s32.totalorder %v226, 144
        %v228 = vsel %vm227, %v221, 0.0
        %v229 = vsel %vm227, %v222, 0.0
        %v230 = vsel %vm227, %v223, 0.0
        %v231 = vsel %vm227, %v224, 0.0
        %v232 = vadd.f32 %v228, 0.0
        %v233 = vadd.f32 %v229, 0.0
        %v234 = vadd.f32 %v230, 0.0
        %v235 = vadd.f32 %v231, 0.0
        %v236 = vsel %vm227, %v221, -inf
        %v237 = vsel %vm227, %v222, -inf
        %v238 = vsel %vm227, %v223, -inf
        %v239 = vsel %vm227, %v224, -inf
        %v240 = vld [vmem:[#allocation2] sm:$0xff]
        %v241 = vld [vmem:[#allocation2 + $0x8] sm:$0xff]
        %v242 = vld [vmem:[#allocation2 + $0x10] sm:$0xff]
        %v243 = vld [vmem:[#allocation2 + $0x18] sm:$0xff]
        %v244 = vadd.f32 %v240, %v232
        %v245 = vadd.f32 %v241, %v233
        %v246 = vadd.f32 %v242, %v234
        %v247 = vadd.f32 %v243, %v235
        %248 = vst [vmem:[#allocation2] sm:$0xff] %v244
        %249 = vst [vmem:[#allocation2 + $0x8] sm:$0xff] %v245
        %250 = vst [vmem:[#allocation2 + $0x10] sm:$0xff] %v246
        %251 = vst [vmem:[#allocation2 + $0x18] sm:$0xff] %v247
        %v252 = vld [vmem:[#allocation3] sm:$0xff]
        %v253 = vld [vmem:[#allocation3 + $0x8] sm:$0xff]
        %v254 = vld [vmem:[#allocation3 + $0x10] sm:$0xff]
        %v255 = vld [vmem:[#allocation3 + $0x18] sm:$0xff]
        %v256 = vmax.f32 %v252, %v236
        %v257 = vmax.f32 %v253, %v237
        %v258 = vmax.f32 %v254, %v238
        %v259 = vmax.f32 %v255, %v239
        %260 = vst [vmem:[#allocation3] sm:$0xff] %v256
        %261 = vst [vmem:[#allocation3 + $0x8] sm:$0xff] %v257
        %262 = vst [vmem:[#allocation3 + $0x10] sm:$0xff] %v258
        %263 = vst [vmem:[#allocation3 + $0x18] sm:$0xff] %v259
        %p264 = scmp.eq.s32.totalorder %s22, 1
        // Predicated region
        $region41: #{tpu_custom_call.1} parent=31 // pred_check
          %p265 = pneg %p264
        $region42: #{tpu_custom_call.1} parent=31 // pred_check_branch
          %267 = sbr.rel (%p265) target = $region44
        $region43: #{tpu_custom_call.1} parent=31 // pred_region
          %v268 = vld [vmem:[#allocation2] sm:$0xff]
          %v269 = vld [vmem:[#allocation2 + $0x8] sm:$0xff]
          %v270 = vld [vmem:[#allocation2 + $0x10] sm:$0xff]
          %v271 = vld [vmem:[#allocation2 + $0x18] sm:$0xff]
          %272 = vadd.xlane.f32.xlu0 %v268
          %v273 = vpop.xlane.xlu0 %272
          %274 = vadd.xlane.f32.xlu0 %v269
          %v275 = vpop.xlane.xlu0 %274
          %276 = vadd.xlane.f32.xlu0 %v270
          %v277 = vpop.xlane.xlu0 %276
          %278 = vadd.xlane.f32.xlu0 %v271
          %v279 = vpop.xlane.xlu0 %278
          %v280 = vmul.f32 %v273, 0.0069444445
          %v281 = vmul.f32 %v275, 0.0069444445
          %v282 = vmul.f32 %v277, 0.0069444445
          %v283 = vmul.f32 %v279, 0.0069444445
          %v284 = vld [vmem:[#allocation3] sm:$0xff]
          %v285 = vld [vmem:[#allocation3 + $0x8] sm:$0xff]
          %v286 = vld [vmem:[#allocation3 + $0x10] sm:$0xff]
          %v287 = vld [vmem:[#allocation3 + $0x18] sm:$0xff]
          %288 = vmax.xlane.f32.xlu0 %v284
          %v289 = vpop.xlane.xlu0 %288
          %290 = vmax.xlane.f32.xlu0 %v285
          %v291 = vpop.xlane.xlu0 %290
          %292 = vmax.xlane.f32.xlu0 %v286
          %v293 = vpop.xlane.xlu0 %292
          %294 = vmax.xlane.f32.xlu0 %v287
          %v295 = vpop.xlane.xlu0 %294
          %vm296 = vcmask 7168
          %v297 = vsel %vm296, %v280, %v289
          %v298 = vsel %vm296, %v281, %v291
          %v299 = vsel %vm296, %v282, %v293
          %v300 = vsel %vm296, %v283, %v295
          %v301 = vld [vmem:[%s1] sm:$0x3]
          %vm302 = vcmask 261120
          %v304 = vsel %vm302, %v301, 0
          %306 = vmatprep.subr.mxu0 0.0
          %307 = vmatpush1.msra.mxu0 %v297
          %308 = vmatprep.subr.mxu0 0.0
          %309 = vmatpush1.msra.mxu0 %v298
          %310 = vmatprep.subr.mxu0 0.0
          %311 = vmatpush1.msra.mxu0 %v299
          %312 = vmatprep.subr.mxu0 0.0
          %313 = vmatpush1.msra.mxu0 %v300
          %314 = vmatprep.subr.mxu0 0.0
          %315 = vmatpush1.msra.mxu0 0.0
          %316 = vmatprep.subr.mxu0 0.0
          %317 = vmatpush1.msra.mxu0 0.0
          %318 = vmatprep.subr.mxu0 0.0
          %319 = vmatpush1.msra.mxu0 0.0
          %320 = vmatprep.subr.mxu0 0.0
          %321 = vmatpush1.msra.mxu0 0.0
          %322 = vmatprep.subr.mxu0 0.0
          %323 = vmatpush1.msra.mxu0 0.0
          %324 = vmatprep.subr.mxu0 0.0
          %325 = vmatpush1.msra.mxu0 0.0
          %326 = vmatprep.subr.mxu0 0.0
          %327 = vmatpush1.msra.mxu0 0.0
          %328 = vmatprep.subr.mxu0 0.0
          %329 = vmatpush1.msra.mxu0 0.0
          %330 = vmatprep.subr.mxu0 0.0
          %331 = vmatpush1.msra.mxu0 0.0
          %332 = vmatprep.subr.mxu0 0.0
          %333 = vmatpush1.msra.mxu0 0.0
          %334 = vmatprep.subr.mxu0 0.0
          %335 = vmatpush1.msra.mxu0 0.0
          %336 = vmatprep.subr.mxu0 0.0
          %337 = vmatpush1.msra.mxu0 0.0
          %338 = vmatprep.subr.mxu0 0.0
          %339 = vmatpush1.msra.mxu0 0.0
          %340 = vmatprep.subr.mxu0 0.0
          %341 = vmatpush1.msra.mxu0 0.0
          %342 = vmatprep.subr.mxu0 0.0
          %343 = vmatpush1.msra.mxu0 0.0
          %344 = vmatprep.subr.mxu0 0.0
          %345 = vmatpush1.msra.mxu0 0.0
          %346 = vmatprep.subr.mxu0 0.0
          %347 = vmatpush1.msra.mxu0 0.0
          %348 = vmatprep.subr.mxu0 0.0
          %349 = vmatpush1.msra.mxu0 0.0
          %350 = vmatprep.subr.mxu0 0.0
          %351 = vmatpush1.msra.mxu0 0.0
          %352 = vmatprep.subr.mxu0 0.0
          %353 = vmatpush1.msra.mxu0 0.0
          %354 = vmatprep.subr.mxu0 0.0
          %355 = vmatpush1.msra.mxu0 0.0
          %356 = vmatprep.subr.mxu0 0.0
          %357 = vmatpush1.msra.mxu0 0.0
          %358 = vmatprep.subr.mxu0 0.0
          %359 = vmatpush1.msra.mxu0 0.0
          %360 = vmatprep.subr.mxu0 0.0
          %361 = vmatpush1.msra.mxu0 0.0
          %362 = vmatprep.subr.mxu0 0.0
          %363 = vmatpush1.msra.mxu0 0.0
          %364 = vmatprep.subr.mxu0 0.0
          %365 = vmatpush1.msra.mxu0 0.0
          %366 = vmatprep.subr.mxu0 0.0
          %367 = vmatpush1.msra.mxu0 0.0
          %368 = vmatprep.subr.mxu0 0.0
          %369 = vmatpush1.msra.mxu0 0.0
          %370 = vmatprep.mubr.f32.mxu0 0.0
          %371 = vmatmul.mubr.f32.gmra.mrb[0].mxu0 %v304
          %v372 = vpop.f32.mrb[0].mxu0
          %v373 = vadd.f32 0.0, %v372
          %v374 = vpop.f32.mrb[0].mxu0
          %375 = vdwg.mxu0
          %v376 = vmax.f32 %v373, 0.0
          %v377 = vld [vmem:[%s2] sm:$0xff]
          %v378 = vld [vmem:[%s2 + $0x8] sm:$0xff]
          %v379 = vld [vmem:[%s2 + $0x10] sm:$0xff]
          %v380 = vld [vmem:[%s2 + $0x18] sm:$0xff]
          %vm381 = vcmask 15360
          %v383 = vsel %vm381, %v377, 0
          %v386 = vsel %vm381, %v378, 0
          %v389 = vsel %vm381, %v379, 0
          %v392 = vsel %vm381, %v380, 0
          %vm394 = vcmask 1041408
          %v396 = vsel %vm394, %v376, 0
          %398 = vmatprep.subr.mxu0 0.0
          %399 = vmatpush1.msra.mxu0 %v396
          %400 = vmatprep.subr.mxu0 0.0
          %401 = vmatpush1.msra.mxu0 0.0
          %402 = vmatprep.subr.mxu0 0.0
          %403 = vmatpush1.msra.mxu0 0.0
          %404 = vmatprep.subr.mxu0 0.0
          %405 = vmatpush1.msra.mxu0 0.0
          %406 = vmatprep.subr.mxu0 0.0
          %407 = vmatpush1.msra.mxu0 0.0
          %408 = vmatprep.subr.mxu0 0.0
          %409 = vmatpush1.msra.mxu0 0.0
          %410 = vmatprep.subr.mxu0 0.0
          %411 = vmatpush1.msra.mxu0 0.0
          %412 = vmatprep.subr.mxu0 0.0
          %413 = vmatpush1.msra.mxu0 0.0
          %414 = vmatprep.subr.mxu0 0.0
          %415 = vmatpush1.msra.mxu0 0.0
          %416 = vmatprep.subr.mxu0 0.0
          %417 = vmatpush1.msra.mxu0 0.0
          %418 = vmatprep.subr.mxu0 0.0
          %419 = vmatpush1.msra.mxu0 0.0
          %420 = vmatprep.subr.mxu0 0.0
          %421 = vmatpush1.msra.mxu0 0.0
          %422 = vmatprep.subr.mxu0 0.0
          %423 = vmatpush1.msra.mxu0 0.0
          %424 = vmatprep.subr.mxu0 0.0
          %425 = vmatpush1.msra.mxu0 0.0
          %426 = vmatprep.subr.mxu0 0.0
          %427 = vmatpush1.msra.mxu0 0.0
          %428 = vmatprep.subr.mxu0 0.0
          %429 = vmatpush1.msra.mxu0 0.0
          %430 = vmatprep.subr.mxu0 0.0
          %431 = vmatpush1.msra.mxu0 0.0
          %432 = vmatprep.subr.mxu0 0.0
          %433 = vmatpush1.msra.mxu0 0.0
          %434 = vmatprep.subr.mxu0 0.0
          %435 = vmatpush1.msra.mxu0 0.0
          %436 = vmatprep.subr.mxu0 0.0
          %437 = vmatpush1.msra.mxu0 0.0
          %438 = vmatprep.subr.mxu0 0.0
          %439 = vmatpush1.msra.mxu0 0.0
          %440 = vmatprep.subr.mxu0 0.0
          %441 = vmatpush1.msra.mxu0 0.0
          %442 = vmatprep.subr.mxu0 0.0
          %443 = vmatpush1.msra.mxu0 0.0
          %444 = vmatprep.subr.mxu0 0.0
          %445 = vmatpush1.msra.mxu0 0.0
          %446 = vmatprep.subr.mxu0 0.0
          %447 = vmatpush1.msra.mxu0 0.0
          %448 = vmatprep.subr.mxu0 0.0
          %449 = vmatpush1.msra.mxu0 0.0
          %450 = vmatprep.subr.mxu0 0.0
          %451 = vmatpush1.msra.mxu0 0.0
          %452 = vmatprep.subr.mxu0 0.0
          %453 = vmatpush1.msra.mxu0 0.0
          %454 = vmatprep.subr.mxu0 0.0
          %455 = vmatpush1.msra.mxu0 0.0
          %456 = vmatprep.subr.mxu0 0.0
          %457 = vmatpush1.msra.mxu0 0.0
          %458 = vmatprep.subr.mxu0 0.0
          %459 = vmatpush1.msra.mxu0 0.0
          %460 = vmatprep.subr.mxu0 0.0
          %461 = vmatpush1.msra.mxu0 0.0
          %462 = vmatprep.mubr.f32.mxu0 0.0
          %463 = vmatmul.mubr.f32.gmra.mrb[0].mxu0 %v383
          %v464 = vpop.f32.mrb[0].mxu0
          %v465 = vadd.f32 0.0, %v464
          %v466 = vpop.f32.mrb[0].mxu0
          %467 = vmatprep.mubr.f32.mxu0 0.0
          %468 = vmatmul.mubr.f32.gmra.mrb[0].mxu0 %v386
          %v469 = vpop.f32.mrb[0].mxu0
          %v470 = vadd.f32 0.0, %v469
          %v471 = vpop.f32.mrb[0].mxu0
          %472 = vmatprep.mubr.f32.mxu0 0.0
          %473 = vmatmul.mubr.f32.gmra.mrb[0].mxu0 %v389
          %v474 = vpop.f32.mrb[0].mxu0
          %v475 = vadd.f32 0.0, %v474
          %v476 = vpop.f32.mrb[0].mxu0
          %477 = vmatprep.mubr.f32.mxu0 0.0
          %478 = vmatmul.mubr.f32.gmra.mrb[0].mxu0 %v392
          %v479 = vpop.f32.mrb[0].mxu0
          %v480 = vadd.f32 0.0, %v479
          %v481 = vpop.f32.mrb[0].mxu0
          %482 = vdwg.mxu0
          %487 = vrot.lane.b32.xlu0 %v465, 127
          %v488 = vpop.permute.xlu0 %487
          %489 = vrot.lane.b32.xlu0 %v470, 127
          %v490 = vpop.permute.xlu0 %489
          %491 = vrot.lane.b32.xlu0 %v475, 127
          %v492 = vpop.permute.xlu0 %491
          %493 = vrot.lane.b32.xlu0 %v480, 127
          %v494 = vpop.permute.xlu0 %493
          %v499 = vadd.f32 %v465, %v488
          %v500 = vadd.f32 %v470, %v490
          %v501 = vadd.f32 %v475, %v492
          %v502 = vadd.f32 %v480, %v494
          %v503 = vxor.u32 %v499, 2147483648
          %v504 = vxor.u32 %v500, 2147483648
          %v505 = vxor.u32 %v501, 2147483648
          %v506 = vxor.u32 %v502, 2147483648
          %v507 = vmul.f32 %v503, 1.442695
          %v508 = vpow.pop %v507
          %v509 = vmul.f32 %v504, 1.442695
          %v510 = vpow.pop %v509
          %v511 = vmul.f32 %v505, 1.442695
          %v512 = vpow.pop %v511
          %v513 = vmul.f32 %v506, 1.442695
          %v514 = vpow.pop %v513
          %v515 = vadd.f32 %v508, 1.0
          %v516 = vadd.f32 %v510, 1.0
          %v517 = vadd.f32 %v512, 1.0
          %v518 = vadd.f32 %v514, 1.0
          %v519 = vrcp.pop %v515
          %v520 = vmul.f32 1.0, %v519
          %v521 = vrcp.pop %v516
          %v522 = vmul.f32 1.0, %v521
          %v523 = vrcp.pop %v517
          %v524 = vmul.f32 1.0, %v523
          %v525 = vrcp.pop %v518
          %v526 = vmul.f32 1.0, %v525
          %527 = vst.msk [vmem:[%s205] sm:$0xff] %vm296, %v520
          %528 = vst.msk [vmem:[%s205 + $0x8] sm:$0xff] %vm296, %v522
          %529 = vst.msk [vmem:[%s205 + $0x10] sm:$0xff] %vm296, %v524
          %530 = vst.msk [vmem:[%s205 + $0x18] sm:$0xff] %vm296, %v526
        $region44: #{tpu_custom_call.1} parent=31 // pred_fallthru
          _
        %p531 = scmp.lt.s32.totalorder %s21, 1
        %s532 = scalar_select %p531, %s21, 1
        %s533 = smul.addr %s532, 4
        %s534 = smul.addr %s533, 8
        %s535 = scalar_lea.vmem %s3, %s534
        // Predicated region
        $region45: #{tpu_custom_call.1} parent=31 // pred_check
          %p536 = pneg %p117
        $region46: #{tpu_custom_call.1} parent=31 // pred_check_branch
          %538 = sbr.rel (%p536) target = $region48
        $region47: #{tpu_custom_call.1} parent=31 // pred_region
          _
        $region48: #{tpu_custom_call.1} parent=31 // pred_fallthru
          _
      $region32: #{tpu_custom_call.1} parent=5 // pred_fallthru
        _
      %p539 = scmp.le.s32.totalorder 2, %s12
      // Predicated region
      $region49: #{tpu_custom_call.1} parent=5 // pred_check
        %p540 = pneg %p539
      $region50: #{tpu_custom_call.1} parent=5 // pred_check_branch
        %542 = sbr.rel (%p540) target = $region52
      $region51: #{tpu_custom_call.1} parent=5 // pred_region
        %s543 = ssub.s32 %s12, 2
        // Predicated region
        $region53: #{tpu_custom_call.1} parent=51 // pred_check
          %p544 = pneg %p123
        $region54: #{tpu_custom_call.1} parent=51 // pred_check_branch
          %546 = sbr.rel (%p544) target = $region56
        $region55: #{tpu_custom_call.1} parent=51 // pred_region
          %p547 = scmp.lt.s32.totalorder %s23, 1
          %s548 = scalar_select %p547, %s23, 1
          %s549 = smul.addr %s548, 4
          %s550 = smul.addr %s549, 8
          %s551 = scalar_lea.vmem %s3, %s550
        $region56: #{tpu_custom_call.1} parent=51 // pred_fallthru
          _
      $region52: #{tpu_custom_call.1} parent=5 // pred_fallthru
        _
    $region6: #{tpu_custom_call.1} parent=1 // loop_footer
      %s16 = sadd.s32 1, %s12
    $region7: #{tpu_custom_call.1} parent=1 // loop_footer_branch
      %11 = sbr.rel target = $region3
    $region8: #{tpu_custom_call.1} parent=1 // loop_exit
      _
    %552 = vsyncpa [#allocation5], 1
    %s553 = scalar_lea.sflag [#allocation5], 1
    %554 = vsyncpa %s553, 1

</llo_original>
